<compile_context>
chip_gen: v5e
topology: v5e:2x2
jax: 0.10.0
libtpu: 0.0.40
codegen_flags: <defaults>
</compile_context>

<pallas_src>
import functools

import numpy as np
import jax
import jax.numpy as jnp
from jax.experimental import pallas as pl
from jax.experimental.pallas import tpu as pltpu


# --------------------------------------------------------------------------
# Noise schedule (numpy glue, mirrors make_beta_schedule / set_new_noise_schedule)
# --------------------------------------------------------------------------
def make_beta_schedule(schedule, n_timestep, linear_start=1e-4, linear_end=2e-2):
    if schedule == "linear":
        betas = np.linspace(linear_start, linear_end, n_timestep, dtype=np.float64)
    elif schedule == "quad":
        betas = (
            np.linspace(linear_start ** 0.5, linear_end ** 0.5, n_timestep,
                        dtype=np.float64) ** 2
        )
    else:
        raise NotImplementedError(schedule)
    return betas


# --------------------------------------------------------------------------
# Layout helpers (lane-dense, full-sublane views)
# --------------------------------------------------------------------------
def _lane_dense_shape(n):
    """Return (rows, lanes, n_pad) with rows*lanes == n_pad >= n,
    lanes % 128 == 0 and rows % 8 == 0 (pads with zeros host-side if needed)."""
    for lanes in (4096, 2048, 1024, 512, 256, 128):
        if n % lanes == 0 and (n // lanes) % 8 == 0:
            return n // lanes, lanes, n
    n_pad = ((n + 1023) // 1024) * 1024
    for lanes in (4096, 2048, 1024, 512, 256, 128):
        if n_pad % lanes == 0 and (n_pad // lanes) % 8 == 0:
            return n_pad // lanes, lanes, n_pad
    return n_pad // 128, 128, n_pad    # unreachable; n_pad % 1024 == 0


def _pick_tile(n, cap, quantum):
    """Largest divisor of n that is <= cap and a multiple of `quantum`
    (or n itself if n <= cap)."""
    if n <= cap:
        return n
    t = (cap // quantum) * quantum
    while t >= quantum:
        if n % t == 0:
            return t
        t -= quantum
    return n        # fallback: single block along this axis (== full extent)


def _ensure_two_grid_steps(B, rows, tr, lanes, tl):
    """Split a tile once if the total grid would degenerate to 1 step (v7x)."""
    if B * (rows // tr) * (lanes // tl) >= 2:
        return tr, tl
    if tl % 256 == 0:
        return tr, tl // 2
    if tr % 16 == 0:
        return tr // 2, tl
    return tr, tl


# --------------------------------------------------------------------------
# Pallas kernels
# --------------------------------------------------------------------------
def _q_sample_kernel(coef_ref, x_ref, n_ref, o_ref):
    """out = s * x_start + sqrt(1 - s^2) * noise  (both coefs precomputed)."""
    b = pl.program_id(0)
    s = coef_ref[b, 0]
    c = coef_ref[b, 1]
    o_ref[...] = (s * x_ref[...].astype(jnp.float32)
                  + c * n_ref[...].astype(jnp.float32)).astype(o_ref.dtype)


def _fused_p_sample_kernel(nl_ref, coef_ref, w_ref, *refs,
                           C, n_img, clip_denoised, add_noise):
    """Fully fused reverse-diffusion step on a (C, TR, TL) tile:

        eps     = tanh(W^T @ [cond; x]) * (1 + 0.1 * noise_level)  (denoise_fn)
        x_recon = c_recip * x - c_recipm1 * eps                    (predict_start)
        mean    = pm1 * clip(x_recon) + pm2 * x                    (q_posterior)
        out     = mean + sigma * z                                 (p_sample)

    Each channel slice is a full lane-dense tile; the 1x1 conv is unrolled VPU
    scalar-broadcast FMAs (weights read as scalars from SMEM).  One output
    channel is finished and stored before the next is started (no concatenate,
    bounded vreg pressure).
    """
    img_refs = refs[:n_img]                       # [condition_x?, x_t]
    z_ref = refs[n_img] if add_noise else None
    o_ref = refs[-1]
    x_ref = img_refs[-1]                          # x_t (torch.cat order [cond, x])

    b = pl.program_id(0)
    nl = nl_ref[b]
    eps_scale = 1.0 + 0.1 * nl

    c_recip = coef_ref[0]
    c_recipm1 = coef_ref[1]
    pm1 = coef_ref[2]
    pm2 = coef_ref[3]
    sigma = coef_ref[4]                           # exp(0.5*log_var); unused if t==0

    for co in range(C):
        # ---- synthetic denoiser: 1x1 conv over channels (VPU only) --------
        acc = None
        ci_g = 0
        for r in img_refs:
            for ci in range(C):
                term = w_ref[ci_g, co] * r[ci].astype(jnp.float32)
                acc = term if acc is None else acc + term
                ci_g += 1
        eps_co = jnp.tanh(acc) * eps_scale

        # ---- fused predict_start_from_noise + q_posterior + p_sample ------
        x_co = x_ref[co].astype(jnp.float32)
        x_recon = c_recip * x_co - c_recipm1 * eps_co
        if clip_denoised:
            x_recon = jnp.clip(x_recon, -1.0, 1.0)
        mean = pm1 * x_recon + pm2 * x_co
        if add_noise:
            mean = mean + sigma * z_ref[co].astype(jnp.float32)
        o_ref[co] = mean.astype(o_ref.dtype)


# --------------------------------------------------------------------------
# Pallas wrappers
# --------------------------------------------------------------------------
def q_sample_pallas(x_start, cont_sqrt_alpha_cumprod, noise):
    B, C, H, W = x_start.shape
    N = C * H * W
    rows, lanes, n_pad = _lane_dense_shape(N)
    tr = _pick_tile(rows, 256, 8)          # <= 256 x 2048 x 4B = 2 MiB per array
    tl = _pick_tile(lanes, 2048, 128)
    tr, tl = _ensure_two_grid_steps(B, rows, tr, lanes, tl)

    out_dtype = x_start.dtype

    def flat(a):
        a = a.reshape(B, N)
        if n_pad != N:
            a = jnp.pad(a, ((0, 0), (0, n_pad - N)))
        return a.reshape(B, rows, lanes)

    x2 = flat(x_start)
    n2 = flat(noise)

    s = jnp.asarray(cont_sqrt_alpha_cumprod, jnp.float32).reshape(-1)
    if s.shape[0] == 1:
        s = jnp.broadcast_to(s, (B,))
    # precompute sqrt(1 - s^2) host-side, clamped >= 0 (no NaN near t=0)
    c = jnp.sqrt(jnp.maximum(1.0 - s * s, 0.0))
    coefs = jnp.stack([s, c], axis=1)                     # (B, 2) in SMEM

    spec = pl.BlockSpec((pl.Squeezed(), tr, tl), lambda b, r, l: (b, r, l))
    block_bytes = tr * tl * x2.dtype.itemsize
    vmem_limit = min(max(int(2 * 3 * block_bytes * 1.5) + (4 << 20), 16 << 20),
                     48 << 20)

    out = pl.pallas_call(
        _q_sample_kernel,
        out_shape=jax.ShapeDtypeStruct((B, rows, lanes), out_dtype),
        grid=(B, rows // tr, lanes // tl),
        in_specs=[
            pl.BlockSpec(memory_space=pltpu.MemorySpace.SMEM),   # (B,2) coefs
            spec,
            spec,
        ],
        out_specs=spec,
        compiler_params=pltpu.CompilerParams(
            dimension_semantics=("parallel", "parallel", "parallel"),
            vmem_limit_bytes=vmem_limit),
        cost_estimate=pl.CostEstimate(
            flops=int(3 * B * n_pad),
            transcendentals=0,
            bytes_accessed=int(3 * B * n_pad * x2.dtype.itemsize)),
    )(coefs, x2, n2)
    return out.reshape(B, n_pad)[:, :N].reshape(B, C, H, W)


def p_sample_pallas(x, condition_x, weight, noise_level, coefs, z=None,
                    clip_denoised=True):
    """One fused reverse-diffusion step.  Returns x_{t-1} with the shape of x."""
    B, C, H, W = x.shape
    HW = H * W
    R, L, hw_pad = _lane_dense_shape(HW)
    tr = _pick_tile(R, 64, 8)              # block <= C x 64 x 1024 x 4B = 1 MiB
    tl = _pick_tile(L, 1024, 128)
    tr, tl = _ensure_two_grid_steps(B, R, tr, L, tl)

    add_noise = z is not None
    out_dtype = x.dtype

    def view(a):
        a = a.reshape(B, C, HW)
        if hw_pad != HW:
            a = jnp.pad(a, ((0, 0), (0, 0), (0, hw_pad - HW)))
        return a.reshape(B, C, R, L)

    imgs = []
    if condition_x is not None:
        imgs.append(view(condition_x))
    imgs.append(view(x))
    n_img = len(imgs)
    Cin = n_img * C
    assert weight.shape == (Cin, C), (weight.shape, (Cin, C))

    extra = [view(z)] if add_noise else []

    spec = pl.BlockSpec((pl.Squeezed(), C, tr, tl), lambda b, r, l: (b, 0, r, l))
    smem = pl.BlockSpec(memory_space=pltpu.MemorySpace.SMEM)

    kern = functools.partial(_fused_p_sample_kernel, C=C, n_img=n_img,
                             clip_denoised=bool(clip_denoised),
                             add_noise=add_noise)

    n_streams = n_img + len(extra) + 1
    block_bytes = C * tr * tl * 4
    vmem_limit = min(max(int(2 * n_streams * block_bytes * 1.5) + (4 << 20),
                         16 << 20), 48 << 20)

    out = pl.pallas_call(
        kern,
        out_shape=jax.ShapeDtypeStruct((B, C, R, L), out_dtype),
        grid=(B, R // tr, L // tl),
        in_specs=[smem, smem, smem] + [spec] * (n_img + len(extra)),
        out_specs=spec,
        compiler_params=pltpu.CompilerParams(
            dimension_semantics=("parallel", "parallel", "parallel"),
            vmem_limit_bytes=vmem_limit),
        cost_estimate=pl.CostEstimate(
            flops=int(B * C * hw_pad * (2 * Cin + 12)),
            transcendentals=int(B * C * hw_pad),
            bytes_accessed=int(n_streams * B * C * hw_pad * 4)),
    )(noise_level, coefs, weight.astype(jnp.float32), *imgs, *extra)
    return out.reshape(B, C, hw_pad)[:, :, :HW].reshape(B, C, H, W)


# --------------------------------------------------------------------------
# GaussianDiffusion (JAX port of the PyTorch module)
# --------------------------------------------------------------------------
class GaussianDiffusion:
    def __init__(self, denoise_fn, channels=1, loss_type="l1", conditional=True,
                 schedule_opt=None, image_height=128, image_width=256):
        # `denoise_fn` here is the (Cin, Cout) channel-mix weight of the
        # synthetic 1x1-conv denoiser; it is fused directly into the p_sample
        # Pallas kernel (no eps round-trip through HBM).
        # TODO(synk): a general learned denoise_fn (U-Net) has no single-kernel
        # Pallas equivalent; only this synthetic denoiser is fused here.
        self.denoise_weight = jnp.asarray(denoise_fn, jnp.float32)
        self.channels = channels
        self.image_height = image_height
        self.image_width = image_width
        self.loss_type = loss_type
        self.conditional = conditional
        if schedule_opt is not None:
            self.set_new_noise_schedule(schedule_opt)

    def set_new_noise_schedule(self, schedule_opt):
        betas = make_beta_schedule(
            schedule=schedule_opt["schedule"],
            n_timestep=schedule_opt["n_timestep"],
            linear_start=schedule_opt["linear_start"],
            linear_end=schedule_opt["linear_end"],
        )
        alphas = 1.0 - betas
        alphas_cumprod = np.cumprod(alphas, axis=0)
        alphas_cumprod_prev = np.append(1.0, alphas_cumprod[:-1])
        self.sqrt_alphas_cumprod_prev = np.sqrt(np.append(1.0, alphas_cumprod))
        (timesteps,) = betas.shape
        self.num_timesteps = int(timesteps)

        posterior_variance = (
            betas * (1.0 - alphas_cumprod_prev) / (1.0 - alphas_cumprod))
        post_logvar = np.log(np.maximum(posterior_variance, 1e-20))

        # numpy copies for static-t scalar lookup (cheap host-side indexing)
        self._np_sqrt_recip_alphas_cumprod = np.sqrt(1.0 / alphas_cumprod)
        self._np_sqrt_recipm1_alphas_cumprod = np.sqrt(1.0 / alphas_cumprod - 1.0)
        self._np_posterior_mean_coef1 = (
            betas * np.sqrt(alphas_cumprod_prev) / (1.0 - alphas_cumprod))
        self._np_posterior_mean_coef2 = (
            (1.0 - alphas_cumprod_prev) * np.sqrt(alphas) / (1.0 - alphas_cumprod))
        self._np_posterior_sigma = np.exp(0.5 * post_logvar)   # precomputed std

        to_j = lambda a: jnp.asarray(a, dtype=jnp.float32)
        self.betas = to_j(betas)
        self.alphas_cumprod = to_j(alphas_cumprod)
        self.alphas_cumprod_prev = to_j(alphas_cumprod_prev)
        self.sqrt_alphas_cumprod = to_j(np.sqrt(alphas_cumprod))
        self.sqrt_one_minus_alphas_cumprod = to_j(np.sqrt(1.0 - alphas_cumprod))
        self.log_one_minus_alphas_cumprod = to_j(np.log(1.0 - alphas_cumprod))
        self.sqrt_recip_alphas_cumprod = to_j(self._np_sqrt_recip_alphas_cumprod)
        self.sqrt_recipm1_alphas_cumprod = to_j(self._np_sqrt_recipm1_alphas_cumprod)
        self.posterior_variance = to_j(posterior_variance)
        self.posterior_log_variance_clipped = to_j(post_logvar)
        self.posterior_mean_coef1 = to_j(self._np_posterior_mean_coef1)
        self.posterior_mean_coef2 = to_j(self._np_posterior_mean_coef2)

    # ---- forward diffusion -------------------------------------------------
    def q_sample(self, x_start, continuous_sqrt_alpha_cumprod, noise=None,
                 noise_key=None):
        if noise is None:
            key = noise_key if noise_key is not None else jax.random.PRNGKey(0)
            noise = jax.random.normal(key, x_start.shape, jnp.float32)
        return q_sample_pallas(x_start, continuous_sqrt_alpha_cumprod, noise)

    # ---- reference (non-hot-path) glue -------------------------------------
    def predict_start_from_noise(self, x_t, t, noise):
        return (self.sqrt_recip_alphas_cumprod[t] * x_t
                - self.sqrt_recipm1_alphas_cumprod[t] * noise)

    def q_posterior(self, x_start, x_t, t):
        mean = (self.posterior_mean_coef1[t] * x_start
                + self.posterior_mean_coef2[t] * x_t)
        return mean, self.posterior_log_variance_clipped[t]

    # ---- reverse diffusion (fused Pallas hot path) --------------------------
    def p_sample(self, x, t, seed=0, clip_denoised=True, condition_x=None,
                 rng_key=None):
        # NOTE: t must be a static Python int (matches the reference module,
        # which uses Python control flow on t).
        B = x.shape[0]
        noise_level = jnp.full(
            (B,), float(self.sqrt_alphas_cumprod_prev[t + 1]), jnp.float32)
        add_noise = t > 0
        sigma = float(self._np_posterior_sigma[t]) if add_noise else 0.0
        coefs = jnp.asarray([
            float(self._np_sqrt_recip_alphas_cumprod[t]),
            float(self._np_sqrt_recipm1_alphas_cumprod[t]),
            float(self._np_posterior_mean_coef1[t]),
            float(self._np_posterior_mean_coef2[t]),
            sigma,
        ], dtype=jnp.float32)
        z = None
        if add_noise:
            key = rng_key if rng_key is not None else jax.random.PRNGKey(int(seed))
            z = jax.random.normal(key, x.shape, jnp.float32)
        return p_sample_pallas(x, condition_x, self.denoise_weight, noise_level,
                               coefs, z=z, clip_denoised=clip_denoised)

    def forward(self, x, *args, **kwargs):
        # TODO(synk): p_losses / p_sample_loop / super_resolution are abstract
        # in the reference module (subclass specific); only the concrete hot
        # paths (q_sample / fused p_sample) are implemented here.
        raise NotImplementedError("p_losses is abstract in the reference module")


# --------------------------------------------------------------------------
# Pure-JAX references (for correctness checks only)
# --------------------------------------------------------------------------
def _ref_q_sample(x_start, s, noise):
    return s * x_start + jnp.sqrt(jnp.maximum(1.0 - s ** 2, 0.0)) * noise


def _ref_denoise(x_cat, nl_scalar, w):
    B, Cin, H, W = x_cat.shape
    xm = x_cat.reshape(B, Cin, H * W)
    y = jnp.einsum("bip,io->bop", xm, w)
    return (jnp.tanh(y) * (1.0 + 0.1 * nl_scalar)).reshape(B, -1, H, W)


def _ref_p_sample_mean(x, cond, w, nl_scalar, coefs, clip_denoised=True):
    eps = _ref_denoise(jnp.concatenate([cond, x], axis=1), nl_scalar, w)
    x_recon = coefs[0] * x - coefs[1] * eps
    if clip_denoised:
        x_recon = jnp.clip(x_recon, -1.0, 1.0)
    return coefs[2] * x_recon + coefs[3] * x


# --------------------------------------------------------------------------
# Demo
# --------------------------------------------------------------------------
if __name__ == "__main__":
    B, C, H, W = 2, 4, 16, 16

    key = jax.random.PRNGKey(0)
    k1, k2, k3 = jax.random.split(key, 3)
    x_start = jax.random.normal(k1, (B, C, H, W), jnp.float32)
    condition_x = jax.random.normal(k2, (B, C, H, W), jnp.float32)
    noise = jax.random.normal(k3, (B, C, H, W), jnp.float32)

    # Deterministic synthetic denoiser weight: (2*C, C) channel-mixing matrix.
    Cin, Cout = 2 * C, C
    weight = (jnp.arange(Cin * Cout, dtype=jnp.float32).reshape(Cin, Cout)
              / float(Cin * Cout) - 0.5) * 0.2

    schedule_opt = dict(schedule="linear", n_timestep=8,
                        linear_start=1e-4, linear_end=2e-2)
    model = GaussianDiffusion(
        denoise_fn=weight, channels=C, loss_type="l1", conditional=True,
        schedule_opt=schedule_opt, image_height=H, image_width=W)

    t = 3
    # forward (q) diffusion step — lane-dense Pallas kernel
    s = jnp.full((B, 1, 1, 1), float(model.sqrt_alphas_cumprod_prev[t]), jnp.float32)
    x_noisy = model.q_sample(x_start, s, noise)

    # one reverse (p) diffusion step (t > 0 -> with noise) — fused kernel
    x_prev = model.p_sample(x_noisy, t, seed=1234 + t, clip_denoised=True,
                            condition_x=condition_x)

    # a t == 0 step (sigma == 0 -> deterministic, noise stream elided)
    x_final = model.p_sample(x_prev, 0, seed=7, clip_denoised=True,
                             condition_x=condition_x)

    jax.block_until_ready((x_noisy, x_prev, x_final))

    # ---- correctness checks against pure-JAX references --------------------
    x_noisy_ref = _ref_q_sample(x_start, s, noise)

    # t = 3 step reference (same host-side z as p_sample draws internally)
    nl3 = float(model.sqrt_alphas_cumprod_prev[t + 1])
    coefs3 = [
        float(model._np_sqrt_recip_alphas_cumprod[t]),
        float(model._np_sqrt_recipm1_alphas_cumprod[t]),
        float(model._np_posterior_mean_coef1[t]),
        float(model._np_posterior_mean_coef2[t]),
    ]
    sigma3 = float(model._np_posterior_sigma[t])
    z3 = jax.random.normal(jax.random.PRNGKey(1234 + t), x_noisy.shape, jnp.float32)
    x_prev_ref = (_ref_p_sample_mean(x_noisy, condition_x, weight, nl3, coefs3)
                  + sigma3 * z3)

    # t = 0 step reference (deterministic)
    nl0 = float(model.sqrt_alphas_cumprod_prev[1])
    coefs0 = [
        float(model._np_sqrt_recip_alphas_cumprod[0]),
        float(model._np_sqrt_recipm1_alphas_cumprod[0]),
        float(model._np_posterior_mean_coef1[0]),
        float(model._np_posterior_mean_coef2[0]),
    ]
    x_final_ref = _ref_p_sample_mean(x_prev, condition_x, weight, nl0, coefs0)

    def max_abs_diff(a, b):
        return float(jnp.max(jnp.abs(a - b)))

    assert x_noisy.shape == (B, C, H, W) and x_prev.shape == (B, C, H, W)
    assert bool(jnp.all(jnp.isfinite(x_prev)))
    assert bool(jnp.all(jnp.isfinite(x_final)))
    assert max_abs_diff(x_noisy, x_noisy_ref) < 1e-4, "q_sample mismatch"
    assert max_abs_diff(x_prev, x_prev_ref) < 2e-3, "fused p_sample (t>0) mismatch"
    assert max_abs_diff(x_final, x_final_ref) < 2e-3, "fused p_sample (t==0) mismatch"

    print("KERNEL_OK")
</pallas_src>

<mosaic_0001>
module attributes {stable_mosaic.version = 11 : i64} {
  func.func @_q_sample_kernel(%arg0: i32, %arg1: i32, %arg2: i32, %arg3: memref<2x2xf32, #tpu.memory_space<smem>>, %arg4: memref<1x8x128xf32, #tpu.memory_space<vmem>>, %arg5: memref<1x8x128xf32, #tpu.memory_space<vmem>>, %arg6: memref<1x8x128xf32, #tpu.memory_space<vmem>>) attributes {dimension_semantics = [#tpu.dimension_semantics<parallel>, #tpu.dimension_semantics<parallel>, #tpu.dimension_semantics<parallel>], iteration_bounds = array<i64: 2, 1, 1>, scalar_prefetch = 0 : i64, scratch_operands = 0 : i64, tpu.core_type = #tpu.core_type<tc>, window_params = [{transform_indices = @transform_0, window_bounds = array<i64: 2, 2>}, {transform_indices = @transform_1, window_bounds = array<i64: 1, 8, 128>}, {transform_indices = @transform_2, window_bounds = array<i64: 1, 8, 128>}, {transform_indices = @transform_3, window_bounds = array<i64: 1, 8, 128>}]} {
    %0 = arith.index_cast %arg0 : i32 to index
    %c0 = arith.constant 0 : index
    %1 = memref.load %arg3[%0, %c0] : memref<2x2xf32, #tpu.memory_space<smem>>
    %2 = arith.index_cast %arg0 : i32 to index
    %c1 = arith.constant 1 : index
    %3 = memref.load %arg3[%2, %c1] : memref<2x2xf32, #tpu.memory_space<smem>>
    %c0_0 = arith.constant 0 : index
    %c0_1 = arith.constant 0 : index
    %c0_2 = arith.constant 0 : index
    %4 = vector.load %arg4[%c0_0, %c0_1, %c0_2] : memref<1x8x128xf32, #tpu.memory_space<vmem>>, vector<1x8x128xf32>
    %5 = vector.shape_cast %4 : vector<1x8x128xf32> to vector<8x128xf32>
    %6 = vector.broadcast %1 : f32 to vector<8x128xf32>
    %7 = arith.mulf %6, %5 : vector<8x128xf32>
    %c0_3 = arith.constant 0 : index
    %c0_4 = arith.constant 0 : index
    %c0_5 = arith.constant 0 : index
    %8 = vector.load %arg5[%c0_3, %c0_4, %c0_5] : memref<1x8x128xf32, #tpu.memory_space<vmem>>, vector<1x8x128xf32>
    %9 = vector.shape_cast %8 : vector<1x8x128xf32> to vector<8x128xf32>
    %10 = vector.broadcast %3 : f32 to vector<8x128xf32>
    %11 = arith.mulf %10, %9 : vector<8x128xf32>
    %12 = arith.addf %7, %11 : vector<8x128xf32>
    %c0_6 = arith.constant 0 : index
    %c0_7 = arith.constant 0 : index
    %c0_8 = arith.constant 0 : index
    %13 = vector.load %arg6[%c0_6, %c0_7, %c0_8] : memref<1x8x128xf32, #tpu.memory_space<vmem>>, vector<1x8x128xf32>
    %14 = vector.shape_cast %13 : vector<1x8x128xf32> to vector<8x128xf32>
    %15 = vector.shape_cast %12 : vector<8x128xf32> to vector<1x8x128xf32>
    tpu.vector_store %arg6[%c0_6, %c0_7, %c0_8], %15 {strides = array<i32>} : memref<1x8x128xf32, #tpu.memory_space<vmem>>, vector<1x8x128xf32>,
    return
  }
  func.func @transform_0(%arg0: i32, %arg1: i32, %arg2: i32) -> (i32, i32) {
    %c0_i32 = arith.constant 0 : i32
    %c0_i32_0 = arith.constant 0 : i32
    %c0_i32_1 = arith.constant 0 : i32
    return %c0_i32, %c0_i32_0 : i32, i32
  }
  func.func @transform_1(%arg0: i32, %arg1: i32, %arg2: i32) -> (i32, i32, i32) {
    %c0_i32 = arith.constant 0 : i32
    return %arg0, %arg1, %arg2 : i32, i32, i32
  }
  func.func @transform_2(%arg0: i32, %arg1: i32, %arg2: i32) -> (i32, i32, i32) {
    %c0_i32 = arith.constant 0 : i32
    return %arg0, %arg1, %arg2 : i32, i32, i32
  }
  func.func @transform_3(%arg0: i32, %arg1: i32, %arg2: i32) -> (i32, i32, i32) {
    %c0_i32 = arith.constant 0 : i32
    return %arg0, %arg1, %arg2 : i32, i32, i32
  }
}

</mosaic_0001>

<llo_original>
// kernel: tpu_custom_call.1
$region0: #{tpu_custom_call.1}
  #allocation0 [shape = 'u32[]', space=smem, size = 0x4, offset = 0x4, fixed_abs, tag = 'smem constant byte address 0x4 - core index']
  #allocation1 [shape = 'u32[72,128]{1,0:T(1,128)}', space=vmem, size = 0x9000, scoped, tag = 'internal scratch']
  %s0 = inlined_call_operand.hbm [shape: f32[2,2], index: 0, kind: input, shape index: {}]
  %s1 = inlined_call_operand.hbm [shape: f32[2,8,128], index: 1, kind: input, shape index: {}]
  %s2 = inlined_call_operand.hbm [shape: f32[2,8,128], index: 2, kind: input, shape index: {}]
  %s3 = inlined_call_operand.hbm [shape: f32[2,8,128], index: 3, kind: output, shape index: {}]
  %s4 = sld [smem:[#allocation0]]
  $region57: #{tpu_custom_call.1} parent=0
    _
  %s6 = ssub.s32 1, %s4
  %s7 = scalar_select 0, %s6, %s4
  $region1: #{tpu_custom_call.1} parent=0
    #allocation2 [shape = 'u8[1024]{0}', space=smem, size = 0x400, scoped, tag = 'input window, operand 0, single buffered']
    #allocation3 [shape = 's32[2]{0}', space=sflag, size = 0x8, scoped, tag = 'scoped memory for tpu_custom_call.1']
    #allocation4 [shape = 's32[2]{0}', space=sflag, size = 0x8, scoped, tag = 'scoped memory for tpu_custom_call.1']
    #allocation5 [shape = 's32[2]{0}', space=sflag, size = 0x8, scoped, tag = 'scoped memory for tpu_custom_call.1']
    #allocation6 [shape = 'u8[8192]{0}', space=vmem, size = 0x2000, scoped, tag = 'input window, operand 1']
    #allocation7 [shape = 'u8[8192]{0}', space=vmem, size = 0x2000, scoped, tag = 'input window, operand 2']
    #allocation8 [shape = 's32[2]{0}', space=sflag, size = 0x8, scoped, tag = 'scoped memory for tpu_custom_call.1']
    #allocation9 [shape = 'u8[8192]{0}', space=vmem, size = 0x2000, scoped, tag = 'output window, operand 0']
    %8 = vsyncpa [#allocation5], 0
    %9 = vsyncpa [#allocation3], 0
    %s10 = scalar_lea.sflag [#allocation3], 1
    %11 = vsyncpa %s10, 0
    %12 = vsyncpa [#allocation8], 0
    %s13 = scalar_lea.sflag [#allocation8], 1
    %14 = vsyncpa %s13, 0
    %15 = vsyncpa [#allocation4], 0
    %s16 = scalar_lea.sflag [#allocation4], 1
    %17 = vsyncpa %s16, 0
    loop: start=0, step=1, limit=4
    $region2: #{tpu_custom_call.1} parent=1 // loop_pre_header
      _
    $region3: #{tpu_custom_call.1} parent=1 // loop_header
      %s19 = sphi 0, %s23
      %p20 = scmp.ge.s32.totalorder %s19, 4
      %s26 = sphi 0, %s45
      %s27 = sphi 0, %s41
      %s28 = sphi 0, %s37
      %s29 = sphi 0, %s26
      %s30 = sphi 0, %s27
      %s31 = sphi 0, %s28
      %s32 = sphi 0, %s29
      %s33 = sphi 0, %s30
      %s34 = sphi 0, %s31
      %s46 = sphi 0, %s46
      %s48 = sphi 0, %s46
      %s49 = sphi 0, %s48
      %s63 = sphi 0, %s49
      %s73 = sphi 0, %s75
      %s76 = sphi 0, %s73
      %s77 = sphi 0, %s76
      %s93 = sphi 0, %s77
      %s103 = sphi 0, %s105
      %s106 = sphi 0, %s103
      %s107 = sphi 0, %s106
      %s123 = sphi 0, %s107
      %s133 = sphi 0, %s135
      %s136 = sphi 0, %s133
      %s137 = sphi 0, %s136
      %s153 = sphi 0, %s137
    $region4: #{tpu_custom_call.1} parent=1 // loop_header_branch
      %22 = sbr.rel (%p20) target = $region8
    $region5: #{tpu_custom_call.1} parent=1 // loop_body
      %s24 = ssub.s32 %s19, 1
      %s25 = ssub.s32 %s19, 2
      %s35 = sadd.s32 1, %s28
      %p36 = scmp.ge.s32.totalorder %s35, 1
      %s37 = scalar_select %p36, 0, %s35
      %s38 = sadd.s32 1, %s27
      %s39 = scalar_select %p36, %s38, %s27
      %p40 = scmp.ge.s32.totalorder %s39, 1
      %s41 = scalar_select %p40, 0, %s39
      %s42 = sadd.s32 1, %s26
      %s43 = scalar_select %p40, %s42, %s26
      %p44 = scmp.ge.s32.totalorder %s43, 2
      %s45 = scalar_select %p44, 0, %s43
      %s47 = sadd.s32 %s46, 1
      %p50 = scmp.eq.s32.totalorder %s19, 1
      %p51 = scmp.ne.s32.totalorder %s46, %s48
      %p52 = scmp.eq.s32.totalorder %s19, 0
      %p53 = por %p51, %p52
      %p54 = scmp.ne.s32.totalorder %s46, %s48
      %p55 = scmp.eq.s32.totalorder %s24, 1
      %p56 = por %p54, %p55
      %p57 = scmp.ne.s32.totalorder %s48, %s49
      %p58 = scmp.eq.s32.totalorder %s24, 0
      %p59 = por %p57, %p58
      %p60 = scmp.ne.s32.totalorder %s48, %s49
      %p61 = scmp.eq.s32.totalorder %s25, 1
      %p62 = por %p60, %p61
      %p64 = scmp.ne.s32.totalorder %s49, %s63
      %p65 = scmp.eq.s32.totalorder %s25, 0
      %p66 = por %p64, %p65
      %s67 = ssub.s32 %s26, %s45
      %s68 = ssub.s32 %s27, %s41
      %s69 = sor.u32 %s67, %s68
      %s70 = ssub.s32 %s28, %s37
      %s71 = sor.u32 %s69, %s70
      %p72 = scmp.eq.s32.totalorder %s71, 0
      %s74 = sadd.s32 %s73, 1
      %s75 = scalar_select %p72, %s73, %s74
      %p78 = pneg %p72
      %p79 = scmp.eq.s32.totalorder %s19, 1
      %p80 = por %p78, %p79
      %p81 = scmp.ne.s32.totalorder %s73, %s76
      %p82 = scmp.eq.s32.totalorder %s19, 0
      %p83 = por %p81, %p82
      %p84 = scmp.ne.s32.totalorder %s73, %s76
      %p85 = scmp.eq.s32.totalorder %s24, 1
      %p86 = por %p84, %p85
      %p87 = scmp.ne.s32.totalorder %s76, %s77
      %p88 = scmp.eq.s32.totalorder %s24, 0
      %p89 = por %p87, %p88
      %p90 = scmp.ne.s32.totalorder %s76, %s77
      %p91 = scmp.eq.s32.totalorder %s25, 1
      %p92 = por %p90, %p91
      %p94 = scmp.ne.s32.totalorder %s77, %s93
      %p95 = scmp.eq.s32.totalorder %s25, 0
      %p96 = por %p94, %p95
      %s97 = ssub.s32 %s26, %s45
      %s98 = ssub.s32 %s27, %s41
      %s99 = sor.u32 %s97, %s98
      %s100 = ssub.s32 %s28, %s37
      %s101 = sor.u32 %s99, %s100
      %p102 = scmp.eq.s32.totalorder %s101, 0
      %s104 = sadd.s32 %s103, 1
      %s105 = scalar_select %p102, %s103, %s104
      %p108 = pneg %p102
      %p109 = scmp.eq.s32.totalorder %s19, 1
      %p110 = por %p108, %p109
      %p111 = scmp.ne.s32.totalorder %s103, %s106
      %p112 = scmp.eq.s32.totalorder %s19, 0
      %p113 = por %p111, %p112
      %p114 = scmp.ne.s32.totalorder %s103, %s106
      %p115 = scmp.eq.s32.totalorder %s24, 1
      %p116 = por %p114, %p115
      %p117 = scmp.ne.s32.totalorder %s106, %s107
      %p118 = scmp.eq.s32.totalorder %s24, 0
      %p119 = por %p117, %p118
      %p120 = scmp.ne.s32.totalorder %s106, %s107
      %p121 = scmp.eq.s32.totalorder %s25, 1
      %p122 = por %p120, %p121
      %p124 = scmp.ne.s32.totalorder %s107, %s123
      %p125 = scmp.eq.s32.totalorder %s25, 0
      %p126 = por %p124, %p125
      %s127 = ssub.s32 %s26, %s45
      %s128 = ssub.s32 %s27, %s41
      %s129 = sor.u32 %s127, %s128
      %s130 = ssub.s32 %s28, %s37
      %s131 = sor.u32 %s129, %s130
      %p132 = scmp.eq.s32.totalorder %s131, 0
      %s134 = sadd.s32 %s133, 1
      %s135 = scalar_select %p132, %s133, %s134
      %p138 = pneg %p132
      %p139 = scmp.eq.s32.totalorder %s19, 1
      %p140 = por %p138, %p139
      %p141 = scmp.ne.s32.totalorder %s133, %s136
      %p142 = scmp.eq.s32.totalorder %s19, 0
      %p143 = por %p141, %p142
      %p144 = scmp.ne.s32.totalorder %s133, %s136
      %p145 = scmp.eq.s32.totalorder %s24, 1
      %p146 = por %p144, %p145
      %p147 = scmp.ne.s32.totalorder %s136, %s137
      %p148 = scmp.eq.s32.totalorder %s24, 0
      %p149 = por %p147, %p148
      %p150 = scmp.ne.s32.totalorder %s136, %s137
      %p151 = scmp.eq.s32.totalorder %s25, 1
      %p152 = por %p150, %p151
      %p154 = scmp.ne.s32.totalorder %s137, %s153
      %p155 = scmp.eq.s32.totalorder %s25, 0
      %p156 = por %p154, %p155
      %p157 = scmp.le.s32.totalorder 1, %s19
      %p158 = scmp.lt.s32.totalorder %s19, 3
      %p159 = pnand %p157, %p158
      %p160 = pneg %p159
      // Predicated region
      $region9: #{tpu_custom_call.1} parent=5 // pred_check
        _
      $region10: #{tpu_custom_call.1} parent=5 // pred_check_branch
        %162 = sbr.rel (%p159) target = $region12
      $region11: #{tpu_custom_call.1} parent=5 // pred_region
        %s163 = ssub.s32 %s19, 1
        // Predicated region
        $region13: #{tpu_custom_call.1} parent=11 // pred_check
          %p164 = pneg %p59
        $region14: #{tpu_custom_call.1} parent=11 // pred_check_branch
          %166 = sbr.rel (%p164) target = $region16
        $region15: #{tpu_custom_call.1} parent=11 // pred_region
          %168 = vsyncadd [#allocation5], 0
          %s170 = sshll.u32 %s0, 4
          %s171 = int_to_ptr.hbm [resolvable:$true] %s170
          %173 = dma.hbm_to_smem %s171, 32, [#allocation2], [#allocation5]
        $region16: #{tpu_custom_call.1} parent=11 // pred_fallthru
          _
      $region12: #{tpu_custom_call.1} parent=5 // pred_fallthru
        _
      %p174 = scmp.lt.s32.totalorder %s19, 2
      // Predicated region
      $region17: #{tpu_custom_call.1} parent=5 // pred_check
        %p175 = pneg %p174
      $region18: #{tpu_custom_call.1} parent=5 // pred_check_branch
        %177 = sbr.rel (%p175) target = $region20
      $region19: #{tpu_custom_call.1} parent=5 // pred_region
        // Predicated region
        $region21: #{tpu_custom_call.1} parent=19 // pred_check
          %p178 = pneg %p83
        $region22: #{tpu_custom_call.1} parent=19 // pred_check_branch
          %180 = sbr.rel (%p178) target = $region24
        $region23: #{tpu_custom_call.1} parent=19 // pred_region
          %s181 = sand.u32 %s73, 1
          %s182 = scalar_lea.sflag [#allocation3], %s181
          %s183 = sand.u32 %s73, 1
          %s184 = smul.addr %s183, 8
          %s185 = scalar_lea.vmem [#allocation6], %s184
          %187 = vsyncadd %s182, 0
          %s188 = sadd.s32 %s28, %s27
          %s189 = sadd.s32 %s188, %s26
          %s190 = smul.addr %s189, 8
          %s191 = scalar_lea.hbm %s1, %s190
          %s193 = sshll.u32 %s191, 4
          %s194 = int_to_ptr.hbm [resolvable:$true] %s193
          %s195 = sshll.u32 %s185, 4
          %s196 = int_to_ptr.vmem [resolvable:$true] %s195
          %198 = dma.hbm_to_vmem [thread:$0]  %s194, 128, %s196, %s182
        $region24: #{tpu_custom_call.1} parent=19 // pred_fallthru
          _
        // Predicated region
        $region25: #{tpu_custom_call.1} parent=19 // pred_check
          %p199 = pneg %p113
        $region26: #{tpu_custom_call.1} parent=19 // pred_check_branch
          %201 = sbr.rel (%p199) target = $region28
        $region27: #{tpu_custom_call.1} parent=19 // pred_region
          %s202 = sand.u32 %s103, 1
          %s203 = scalar_lea.sflag [#allocation8], %s202
          %s204 = sand.u32 %s103, 1
          %s205 = smul.addr %s204, 8
          %s206 = scalar_lea.vmem [#allocation7], %s205
          %208 = vsyncadd %s203, 0
          %s209 = sadd.s32 %s28, %s27
          %s210 = sadd.s32 %s209, %s26
          %s211 = smul.addr %s210, 8
          %s212 = scalar_lea.hbm %s2, %s211
          %s214 = sshll.u32 %s212, 4
          %s215 = int_to_ptr.hbm [resolvable:$true] %s214
          %s216 = sshll.u32 %s206, 4
          %s217 = int_to_ptr.vmem [resolvable:$true] %s216
          %219 = dma.hbm_to_vmem [thread:$0]  %s215, 128, %s217, %s203
        $region28: #{tpu_custom_call.1} parent=19 // pred_fallthru
          _
      $region20: #{tpu_custom_call.1} parent=5 // pred_fallthru
        _
      %p220 = scmp.le.s32.totalorder 1, %s19
      %p221 = scmp.lt.s32.totalorder %s19, 3
      %p222 = pnand %p220, %p221
      %p223 = pneg %p222
      // Predicated region
      $region29: #{tpu_custom_call.1} parent=5 // pred_check
        _
      $region30: #{tpu_custom_call.1} parent=5 // pred_check_branch
        %225 = sbr.rel (%p222) target = $region32
      $region31: #{tpu_custom_call.1} parent=5 // pred_region
        %s226 = ssub.s32 %s19, 1
        // Predicated region
        $region33: #{tpu_custom_call.1} parent=31 // pred_check
          %p227 = pneg %p59
        $region34: #{tpu_custom_call.1} parent=31 // pred_check_branch
          %229 = sbr.rel (%p227) target = $region36
        $region35: #{tpu_custom_call.1} parent=31 // pred_region
          %231 = dma.done [#allocation5], 32
        $region36: #{tpu_custom_call.1} parent=31 // pred_fallthru
          _
        %s232 = sand.u32 %s76, 1
        %s233 = scalar_lea.sflag [#allocation3], %s232
        %s234 = sand.u32 %s76, 1
        %s235 = smul.addr %s234, 8
        %s236 = scalar_lea.vmem [#allocation6], %s235
        // Predicated region
        $region37: #{tpu_custom_call.1} parent=31 // pred_check
          %p237 = pneg %p89
        $region38: #{tpu_custom_call.1} parent=31 // pred_check_branch
          %239 = sbr.rel (%p237) target = $region40
        $region39: #{tpu_custom_call.1} parent=31 // pred_region
          %241 = dma.done %s233, 128
        $region40: #{tpu_custom_call.1} parent=31 // pred_fallthru
          _
        %s242 = sand.u32 %s106, 1
        %s243 = scalar_lea.sflag [#allocation8], %s242
        %s244 = sand.u32 %s106, 1
        %s245 = smul.addr %s244, 8
        %s246 = scalar_lea.vmem [#allocation7], %s245
        // Predicated region
        $region41: #{tpu_custom_call.1} parent=31 // pred_check
          %p247 = pneg %p119
        $region42: #{tpu_custom_call.1} parent=31 // pred_check_branch
          %249 = sbr.rel (%p247) target = $region44
        $region43: #{tpu_custom_call.1} parent=31 // pred_region
          %251 = dma.done %s243, 128
        $region44: #{tpu_custom_call.1} parent=31 // pred_fallthru
          _
        %252 = sfence
        %p253 = pneg %p59
        %p254 = pneg %p56
        %s255 = sand.u32 %s76, 1
        %s256 = scalar_lea.sflag [#allocation3], %s255
        %s257 = sand.u32 %s76, 1
        %s258 = smul.addr %s257, 8
        %s259 = scalar_lea.vmem [#allocation6], %s258
        %p260 = pneg %p89
        %p261 = pneg %p86
        %s262 = sand.u32 %s106, 1
        %s263 = scalar_lea.sflag [#allocation8], %s262
        %s264 = sand.u32 %s106, 1
        %s265 = smul.addr %s264, 8
        %s266 = scalar_lea.vmem [#allocation7], %s265
        %p267 = pneg %p119
        %p268 = pneg %p116
        %p269 = pneg %p149
        %p270 = pneg %p146
        %s271 = sand.u32 %s136, 1
        %s272 = scalar_lea.sflag [#allocation4], %s271
        %s273 = sand.u32 %s136, 1
        %s274 = smul.addr %s273, 8
        %s275 = scalar_lea.vmem [#allocation9], %s274
        %s276 = smul.u32 %s29, 128
        %s277 = sld [smem:[#allocation2 + %s276]]
        %s278 = sadd.s32 %s276, 1
        %s279 = sld [smem:[#allocation2 + %s278]]
        %v280 = vld [vmem:[%s236] sm:$0xff]
        %v281 = vstv %s277
        %v282 = vmul.f32 %v281, %v280
        %v283 = vld [vmem:[%s246] sm:$0xff]
        %v284 = vstv %s279
        %v285 = vmul.f32 %v284, %v283
        %v286 = vadd.f32 %v282, %v285
        %287 = vst [vmem:[%s275] sm:$0xff] %v286
        %s288 = sand.u32 %s136, 1
        %s289 = scalar_lea.sflag [#allocation4], %s288
        %s290 = sand.u32 %s136, 1
        %s291 = smul.addr %s290, 8
        %s292 = scalar_lea.vmem [#allocation9], %s291
        // Predicated region
        $region45: #{tpu_custom_call.1} parent=31 // pred_check
          %p293 = pneg %p146
        $region46: #{tpu_custom_call.1} parent=31 // pred_check_branch
          %295 = sbr.rel (%p293) target = $region48
        $region47: #{tpu_custom_call.1} parent=31 // pred_region
          %297 = vsyncadd %s289, 0
          %s298 = sadd.s32 %s31, %s30
          %s299 = sadd.s32 %s298, %s29
          %s300 = smul.addr %s299, 8
          %s301 = scalar_lea.hbm %s3, %s300
          %s303 = sshll.u32 %s292, 4
          %s304 = int_to_ptr.vmem [resolvable:$true] %s303
          %s305 = sshll.u32 %s301, 4
          %s306 = int_to_ptr.hbm [resolvable:$true] %s305
          %308 = dma.vmem_to_hbm [thread:$0]  %s304, 128, %s306, %s289
        $region48: #{tpu_custom_call.1} parent=31 // pred_fallthru
          _
      $region32: #{tpu_custom_call.1} parent=5 // pred_fallthru
        _
      %p309 = scmp.le.s32.totalorder 2, %s19
      // Predicated region
      $region49: #{tpu_custom_call.1} parent=5 // pred_check
        %p310 = pneg %p309
      $region50: #{tpu_custom_call.1} parent=5 // pred_check_branch
        %312 = sbr.rel (%p310) target = $region52
      $region51: #{tpu_custom_call.1} parent=5 // pred_region
        %s313 = ssub.s32 %s19, 2
        // Predicated region
        $region53: #{tpu_custom_call.1} parent=51 // pred_check
          %p314 = pneg %p152
        $region54: #{tpu_custom_call.1} parent=51 // pred_check_branch
          %316 = sbr.rel (%p314) target = $region56
        $region55: #{tpu_custom_call.1} parent=51 // pred_region
          %s317 = sand.u32 %s137, 1
          %s318 = scalar_lea.sflag [#allocation4], %s317
          %s319 = sand.u32 %s137, 1
          %s320 = smul.addr %s319, 8
          %s321 = scalar_lea.vmem [#allocation9], %s320
          %323 = dma.done %s318, 128
        $region56: #{tpu_custom_call.1} parent=51 // pred_fallthru
          _
      $region52: #{tpu_custom_call.1} parent=5 // pred_fallthru
        _
    $region6: #{tpu_custom_call.1} parent=1 // loop_footer
      %s23 = sadd.s32 1, %s19
    $region7: #{tpu_custom_call.1} parent=1 // loop_footer_branch
      %18 = sbr.rel target = $region3
    $region8: #{tpu_custom_call.1} parent=1 // loop_exit
      _
    %324 = vsyncpa [#allocation3], 1
    %s325 = scalar_lea.sflag [#allocation3], 1
    %326 = vsyncpa %s325, 1
    %327 = vsyncpa [#allocation8], 1
    %s328 = scalar_lea.sflag [#allocation8], 1
    %329 = vsyncpa %s328, 1
    %330 = vsyncpa [#allocation4], 1
    %s331 = scalar_lea.sflag [#allocation4], 1
    %332 = vsyncpa %s331, 1
    %333 = vsyncpa [#allocation5], 1
    %s334 = scalar_lea.sflag [#allocation5], 1
    %335 = vsyncpa %s334, 1

</llo_original>
